<compile_context>
chip_gen: v6e
topology: v6e:2x2x1
jax: 0.10.0
libtpu: 0.0.40
codegen_flags: <defaults>
</compile_context>

<pallas_src>
import functools
import math

import jax
import jax.numpy as jnp
from jax import lax
from jax.experimental import pallas as pl
from jax.experimental.pallas import tpu as pltpu


# ---------------------------------------------------------------------------
# Hardware / tiling helpers
# ---------------------------------------------------------------------------

def _vmem_capacity_bytes():
    """Physical VMEM per core, queried at trace time (fallback: v7x 64 MiB)."""
    try:
        cap = int(getattr(pltpu.get_tpu_info(), "vmem_capacity_bytes"))
        if cap > 0:
            return cap
    except Exception:
        pass
    return 64 << 20


def _sublane_unit(dtype_bytes):
    """Native sublane tile: 8 for f32, 16 for bf16, 32 for int8/fp8."""
    return max(8, 32 // max(1, dtype_bytes))


def _divisor_tile(total, unit, cap_units):
    """Largest multiple of `unit` dividing `total`, at most cap_units*unit.

    Requires total % unit == 0.  Always returns at least `unit`.
    """
    k = total // unit
    cap = max(1, int(cap_units))
    best = 1
    d = 1
    while d * d <= k:
        if k % d == 0:
            if d <= cap and d > best:
                best = d
            q = k // d
            if q <= cap and q > best:
                best = q
        d += 1
    return best * unit


def _choose_tiles(N, C, HW, dtype_bytes, sub_unit, max_block_bytes):
    """Pick (nb, tc, thw) block dims.  HW must already be a multiple of 128."""
    # Lane (spatial) tile: lane-dense, 128-aligned, bounded so the in-kernel
    # chunked accumulation stays a short unrolled loop (<= 64 chunks).
    lane_cap_elems = max(128, min(8192,
                                  max_block_bytes // (sub_unit * dtype_bytes)))
    thw = _divisor_tile(HW, 128, lane_cap_elems // 128)
    # Sublane (channel) tile under the per-block byte budget.
    if C % sub_unit == 0:
        cap_sub = max(1, max_block_bytes // (sub_unit * thw * dtype_bytes))
        tc = _divisor_tile(C, sub_unit, cap_sub)
    else:
        tc = C  # full extent is always a legal second-to-last block dim
    # Batch elements per block: amortize per-step overhead.
    cap_n = max(1, max_block_bytes // max(1, tc * thw * dtype_bytes))
    nb = _divisor_tile(N, 1, cap_n)
    # Megacore (v7x): keep at least 2 blocks on the parallel (N, C) axes.
    if (N // nb) * (C // tc) < 2:
        if N >= 2:
            nb = _divisor_tile(N, 1, max(1, N // 2))
        elif C % sub_unit == 0 and (C // sub_unit) >= 2:
            tc = _divisor_tile(C, sub_unit, max(1, (C // sub_unit) // 2))
    return nb, tc, thw


def _vmem_limit_bytes(total_block_bytes, vmem_cap):
    """Double-buffered blocks + headroom, clamped to ~75% of physical VMEM."""
    need = 2 * int(total_block_bytes) + (8 << 20)
    ceiling = int(vmem_cap) * 3 // 4
    return int(min(ceiling, max(16 << 20, need)))


# ---------------------------------------------------------------------------
# Kernels
# ---------------------------------------------------------------------------

def _pool_kernel(x_ref, sum_ref, acc_ref):
    """Spatial partial sums.

    x_ref: (nb, tc, thw) input dtype; acc_ref: (nb, tc, 128) f32 scratch,
    accumulated with plain VPU adds; sum_ref: (nb, tc, 1) f32, written only in
    the last-step epilogue (single cross-lane reduce + width-1 store).
    """
    nchunks = x_ref.shape[-1] // 128

    @pl.when(pl.program_id(2) == 0)
    def _():
        acc_ref[...] = jnp.zeros_like(acc_ref)

    def body(i, acc):
        off = pl.multiple_of(i * 128, 128)
        return acc + x_ref[:, :, pl.ds(off, 128)].astype(jnp.float32)

    acc_ref[...] = lax.fori_loop(0, nchunks, body, acc_ref[...], unroll=True)

    @pl.when(pl.program_id(2) == pl.num_programs(2) - 1)
    def _():
        sum_ref[...] = jnp.sum(acc_ref[...], axis=-1, keepdims=True)


def _excite_kernel(psum_ref, w1t_ref, w2t_ref, s_ref, *, inv_hw):
    """Batched excite: s = sigmoid(relu((sum/HW) @ W1^T) @ W2^T) for all N."""
    pooled = (psum_ref[...] * inv_hw).astype(w1t_ref.dtype)        # (N, C)
    h = jnp.dot(pooled, w1t_ref[...],
                preferred_element_type=jnp.float32)                # (N, C_red)
    h = jnp.maximum(h, 0.0)                                        # ReLU
    s = jnp.dot(h.astype(w2t_ref.dtype), w2t_ref[...],
                preferred_element_type=jnp.float32)                # (N, C)
    s_ref[...] = jax.nn.sigmoid(s).astype(s_ref.dtype)             # Sigmoid


def _scale_kernel(x_ref, s_ref, o_ref):
    """Broadcast scale in the input dtype.  x/o: (nb, tc, thw); s: (nb, tc, 1)."""
    o_ref[...] = x_ref[...] * s_ref[...]


def _fused_kernel(x_ref, w1t_ref, w2t_ref, o_ref, *, inv_hw):
    """Whole SE block with x VMEM-resident: pool + excite + scale in one pass."""
    x = x_ref[...]                                                  # (N, C, HW)
    pooled = jnp.sum(x, axis=-1, dtype=jnp.float32) * inv_hw        # (N, C)
    h = jnp.dot(pooled.astype(w1t_ref.dtype), w1t_ref[...],
                preferred_element_type=jnp.float32)                 # (N, C_red)
    h = jnp.maximum(h, 0.0)
    s = jnp.dot(h.astype(w2t_ref.dtype), w2t_ref[...],
                preferred_element_type=jnp.float32)                 # (N, C)
    s = jax.nn.sigmoid(s).astype(x.dtype)
    o_ref[...] = x * s[:, :, None]


# ---------------------------------------------------------------------------
# Wrapper
# ---------------------------------------------------------------------------

def se_module_forward(x_nchw, w1, w2, *, force_tiled=False):
    """SEModule forward.  x: (N, C, H, W); w1: (C_red, C); w2: (C, C_red)."""
    N, C, H, W = x_nchw.shape
    C_red = w1.shape[0]
    HW = H * W
    dtype = x_nchw.dtype
    dtype_bytes = jnp.dtype(dtype).itemsize
    sub_unit = _sublane_unit(dtype_bytes)
    vmem_cap = _vmem_capacity_bytes()

    x_flat = x_nchw.reshape(N, C, HW)
    w1t = jnp.transpose(w1)    # (C, C_red)
    w2t = jnp.transpose(w2)    # (C_red, C)
    w_bytes = (w1t.size + w2t.size) * jnp.dtype(w1.dtype).itemsize
    x_bytes = N * C * HW * dtype_bytes
    inv_hw = float(1.0 / HW)

    # ------------------------------------------------------------------ #
    # Fused single-pass path: whole activation (in + out, double-buffer-
    # conservative) fits well inside this generation's VMEM.
    # ------------------------------------------------------------------ #
    fused_need = 4 * x_bytes + 2 * w_bytes + (8 << 20)
    if (not force_tiled) and fused_need <= (vmem_cap * 3 // 4):
        out_flat = pl.pallas_call(
            functools.partial(_fused_kernel, inv_hw=inv_hw),
            out_shape=jax.ShapeDtypeStruct((N, C, HW), dtype),
            grid_spec=pltpu.PrefetchScalarGridSpec(
                num_scalar_prefetch=0,
                grid=(1,),
                in_specs=[
                    pl.BlockSpec((N, C, HW), lambda i: (0, 0, 0)),
                    pl.BlockSpec((C, C_red), lambda i: (0, 0)),
                    pl.BlockSpec((C_red, C), lambda i: (0, 0)),
                ],
                out_specs=pl.BlockSpec((N, C, HW), lambda i: (0, 0, 0)),
            ),
            compiler_params=pltpu.CompilerParams(
                dimension_semantics=("arbitrary",),
                vmem_limit_bytes=_vmem_limit_bytes(
                    2 * x_bytes + w_bytes, vmem_cap)),
            cost_estimate=pl.CostEstimate(
                flops=int(2 * N * C * HW + 4 * N * C * C_red),
                transcendentals=int(N * C),
                bytes_accessed=int(2 * x_bytes + w_bytes)),
        )(x_flat, w1t, w2t)
        return out_flat.reshape(N, C, H, W)

    # ------------------------------------------------------------------ #
    # Tiled three-stage path.
    # ------------------------------------------------------------------ #
    # Zero-pad HW up to a 128 multiple so all blocks are lane-dense (padding
    # does not change the sum; the padded output tail is sliced off).
    HW_pad = HW if HW % 128 == 0 else ((HW + 127) // 128) * 128
    if HW_pad != HW:
        x_flat = jnp.pad(x_flat, ((0, 0), (0, 0), (0, HW_pad - HW)))

    # Per-stage block budgets (generation-aware, per perf review):
    #   pool : 1 streamed input + tiny resident output  ->  ~cap/5, <=16 MiB
    #   scale: x-in, s-in, x-out all double-buffered    ->  ~cap/8, <=16 MiB
    pool_budget = min(16 << 20, vmem_cap // 5)
    scale_budget = min(16 << 20, vmem_cap // 8)

    nb_p, tc_p, thw_p = _choose_tiles(N, C, HW_pad, dtype_bytes, sub_unit,
                                      pool_budget)
    nb_s, tc_s, thw_s = _choose_tiles(N, C, HW_pad, dtype_bytes, sub_unit,
                                      scale_budget)

    # ---- Stage 1: spatial sum (f32 partial sums, chunked VPU accumulation)
    pool_grid = (N // nb_p, C // tc_p, HW_pad // thw_p)
    pool_block_bytes = (nb_p * tc_p * thw_p * dtype_bytes     # x block
                        + nb_p * tc_p * 4                     # out block
                        + nb_p * tc_p * 128 * 4)              # acc scratch
    pooled_sum = pl.pallas_call(
        _pool_kernel,
        out_shape=jax.ShapeDtypeStruct((N, C, 1), jnp.float32),
        grid_spec=pltpu.PrefetchScalarGridSpec(
            num_scalar_prefetch=0,
            grid=pool_grid,
            in_specs=[pl.BlockSpec((nb_p, tc_p, thw_p),
                                   lambda n, c, h: (n, c, h))],
            out_specs=pl.BlockSpec((nb_p, tc_p, 1),
                                   lambda n, c, h: (n, c, 0)),
            scratch_shapes=[pltpu.VMEM((nb_p, tc_p, 128), jnp.float32)],
        ),
        compiler_params=pltpu.CompilerParams(
            dimension_semantics=("parallel", "parallel", "arbitrary"),
            vmem_limit_bytes=_vmem_limit_bytes(pool_block_bytes, vmem_cap)),
        cost_estimate=pl.CostEstimate(
            flops=int(N * C * HW_pad),
            transcendentals=0,
            bytes_accessed=int(N * C * HW_pad * dtype_bytes + N * C * 4)),
    )(x_flat)

    # ---- Stage 2: excite (tiny one-step batched matmuls) -------------------
    pooled_2d = pooled_sum.reshape(N, C)
    excite_bytes = N * C * 4 + w_bytes + N * C * dtype_bytes
    s_2d = pl.pallas_call(
        functools.partial(_excite_kernel, inv_hw=inv_hw),
        out_shape=jax.ShapeDtypeStruct((N, C), dtype),
        grid_spec=pltpu.PrefetchScalarGridSpec(
            num_scalar_prefetch=0,
            grid=(1,),
            in_specs=[
                pl.BlockSpec((N, C), lambda i: (0, 0)),
                pl.BlockSpec((C, C_red), lambda i: (0, 0)),
                pl.BlockSpec((C_red, C), lambda i: (0, 0)),
            ],
            out_specs=pl.BlockSpec((N, C), lambda i: (0, 0)),
        ),
        compiler_params=pltpu.CompilerParams(
            dimension_semantics=("arbitrary",),
            vmem_limit_bytes=_vmem_limit_bytes(excite_bytes, vmem_cap)),
        cost_estimate=pl.CostEstimate(
            flops=int(4 * N * C * C_red),
            transcendentals=int(N * C),
            bytes_accessed=int(excite_bytes)),
    )(pooled_2d, w1t, w2t)

    # ---- Stage 3: broadcast scale (streaming, all-parallel grid) -----------
    s = s_2d.reshape(N, C, 1)
    scale_grid = (N // nb_s, C // tc_s, HW_pad // thw_s)
    scale_block_bytes = (2 * nb_s * tc_s * thw_s * dtype_bytes
                         + nb_s * tc_s * dtype_bytes)
    out_flat = pl.pallas_call(
        _scale_kernel,
        out_shape=jax.ShapeDtypeStruct((N, C, HW_pad), dtype),
        grid_spec=pltpu.PrefetchScalarGridSpec(
            num_scalar_prefetch=0,
            grid=scale_grid,
            in_specs=[
                pl.BlockSpec((nb_s, tc_s, thw_s), lambda n, c, h: (n, c, h)),
                pl.BlockSpec((nb_s, tc_s, 1), lambda n, c, h: (n, c, 0)),
            ],
            out_specs=pl.BlockSpec((nb_s, tc_s, thw_s),
                                   lambda n, c, h: (n, c, h)),
        ),
        compiler_params=pltpu.CompilerParams(
            dimension_semantics=("parallel", "parallel", "parallel"),
            vmem_limit_bytes=_vmem_limit_bytes(scale_block_bytes, vmem_cap)),
        cost_estimate=pl.CostEstimate(
            flops=int(N * C * HW_pad),
            transcendentals=0,
            bytes_accessed=int(2 * N * C * HW_pad * dtype_bytes
                               + N * C * dtype_bytes)),
    )(x_flat, s)

    if HW_pad != HW:
        out_flat = out_flat[:, :, :HW]
    return out_flat.reshape(N, C, H, W)


# ---------------------------------------------------------------------------
# Reference + test
# ---------------------------------------------------------------------------

def _ref_se(x, w1, w2):
    pooled = jnp.mean(x, axis=(2, 3))                       # (N, C)
    h = jnp.maximum(pooled @ w1.T, 0.0)                     # (N, C_red)
    s = jax.nn.sigmoid(h @ w2.T)                            # (N, C)
    return x * s[:, :, None, None]


if __name__ == "__main__":
    key = jax.random.PRNGKey(0)
    k_x, k_w1, k_w2, k_x2 = jax.random.split(key, 4)

    # Small shapes consistent with SEModule(channels=4, reduction=2)
    N, C, H, W = 2, 4, 16, 16
    reduction = 2
    C_red = C // reduction

    x = jax.random.normal(k_x, (N, C, H, W), dtype=jnp.float32)

    # fc1: xavier_uniform_ (1x1 conv: fan_in=C, fan_out=C_red)
    bound1 = math.sqrt(6.0 / (C + C_red))
    w1 = jax.random.uniform(k_w1, (C_red, C), minval=-bound1, maxval=bound1,
                            dtype=jnp.float32)
    # fc2: PyTorch default Conv2d init (kaiming uniform, fan_in=C_red)
    bound2 = 1.0 / math.sqrt(C_red)
    w2 = jax.random.uniform(k_w2, (C, C_red), minval=-bound2, maxval=bound2,
                            dtype=jnp.float32)

    ref = _ref_se(x, w1, w2)

    # 1) Fused VMEM-resident fast path (default dispatch for small x).
    out_fused = jax.block_until_ready(se_module_forward(x, w1, w2))
    assert out_fused.shape == (N, C, H, W)
    assert jnp.allclose(out_fused, ref, atol=1e-5, rtol=1e-5), \
        "fused path mismatch vs reference"

    # 2) Tiled three-stage path on the same inputs.
    out_tiled = jax.block_until_ready(
        se_module_forward(x, w1, w2, force_tiled=True))
    assert jnp.allclose(out_tiled, ref, atol=1e-5, rtol=1e-5), \
        "tiled path mismatch vs reference"

    # 3) Tiled path with HW not a multiple of 128 (7x7 map -> 128-lane pad).
    x2 = jax.random.normal(k_x2, (N, C, 7, 7), dtype=jnp.float32)
    ref2 = _ref_se(x2, w1, w2)
    out2 = jax.block_until_ready(
        se_module_forward(x2, w1, w2, force_tiled=True))
    assert jnp.allclose(out2, ref2, atol=1e-5, rtol=1e-5), \
        "padded tiled path mismatch vs reference"

    print("KERNEL_OK")
</pallas_src>

<mosaic_0001>
module attributes {stable_mosaic.version = 11 : i64} {
  func.func @_fused_kernel(%arg0: i32, %arg1: memref<2x4x256xf32, #tpu.memory_space<vmem>>, %arg2: memref<4x2xf32, #tpu.memory_space<vmem>>, %arg3: memref<2x4xf32, #tpu.memory_space<vmem>>, %arg4: memref<2x4x256xf32, #tpu.memory_space<vmem>>) attributes {dimension_semantics = [#tpu.dimension_semantics<arbitrary>], iteration_bounds = array<i64: 1>, scalar_prefetch = 0 : i64, scratch_operands = 0 : i64, tpu.core_type = #tpu.core_type<tc>, window_params = [{pipeline_mode = #tpu.pipeline_mode<synchronous>, transform_indices = @transform_0, window_bounds = array<i64: 2, 4, 256>}, {pipeline_mode = #tpu.pipeline_mode<synchronous>, transform_indices = @transform_1, window_bounds = array<i64: 4, 2>}, {pipeline_mode = #tpu.pipeline_mode<synchronous>, transform_indices = @transform_2, window_bounds = array<i64: 2, 4>}, {pipeline_mode = #tpu.pipeline_mode<synchronous>, transform_indices = @transform_3, window_bounds = array<i64: 2, 4, 256>}]} {
    %c0 = arith.constant 0 : index
    %c0_0 = arith.constant 0 : index
    %c0_1 = arith.constant 0 : index
    %0 = vector.load %arg1[%c0, %c0_0, %c0_1] : memref<2x4x256xf32, #tpu.memory_space<vmem>>, vector<2x4x256xf32>
    %cst = arith.constant dense<0.000000e+00> : vector<2x4xf32>
    %1 = vector.multi_reduction <add>, %0, %cst [2] : vector<2x4x256xf32> to vector<2x4xf32>
    %cst_2 = arith.constant 3.906250e-03 : f32
    %2 = vector.broadcast %cst_2 : f32 to vector<2x4xf32>
    %3 = arith.mulf %1, %2 : vector<2x4xf32>
    %c0_3 = arith.constant 0 : index
    %c0_4 = arith.constant 0 : index
    %4 = vector.load %arg2[%c0_3, %c0_4] : memref<4x2xf32, #tpu.memory_space<vmem>>, vector<4x2xf32>
    %cst_5 = arith.constant dense<0.000000e+00> : vector<2x2xf32>
    %5 = tpu.matmul %3, %4, %cst_5 {dimension_numbers = #tpu.dot_dimension_numbers<[1], [0], [0], [1], [0, 0, 1, 1], [], []>} : vector<2x4xf32>, vector<4x2xf32>, vector<2x2xf32> -> vector<2x2xf32>
    %cst_6 = arith.constant 0.000000e+00 : f32
    %6 = vector.broadcast %cst_6 : f32 to vector<2x2xf32>
    %7 = arith.maximumf %5, %6 : vector<2x2xf32>
    %c0_7 = arith.constant 0 : index
    %c0_8 = arith.constant 0 : index
    %8 = vector.load %arg3[%c0_7, %c0_8] : memref<2x4xf32, #tpu.memory_space<vmem>>, vector<2x4xf32>
    %cst_9 = arith.constant dense<0.000000e+00> : vector<2x4xf32>
    %9 = tpu.matmul %7, %8, %cst_9 {dimension_numbers = #tpu.dot_dimension_numbers<[1], [0], [0], [1], [0, 0, 1, 1], [], []>} : vector<2x2xf32>, vector<2x4xf32>, vector<2x4xf32> -> vector<2x4xf32>
    %10 = arith.negf %9 : vector<2x4xf32>
    %11 = math.exp %10 : vector<2x4xf32>
    %cst_10 = arith.constant 1.000000e+00 : f32
    %12 = vector.broadcast %cst_10 : f32 to vector<2x4xf32>
    %13 = arith.addf %12, %11 : vector<2x4xf32>
    %14 = arith.divf %12, %13 : vector<2x4xf32>
    %15 = vector.shape_cast %14 : vector<2x4xf32> to vector<2x4x1xf32>
    %16 = vector.broadcast %15 : vector<2x4x1xf32> to vector<2x4x256xf32>
    %17 = arith.mulf %0, %16 : vector<2x4x256xf32>
    %c0_11 = arith.constant 0 : index
    %c0_12 = arith.constant 0 : index
    %c0_13 = arith.constant 0 : index
    %18 = vector.load %arg4[%c0_11, %c0_12, %c0_13] : memref<2x4x256xf32, #tpu.memory_space<vmem>>, vector<2x4x256xf32>
    tpu.vector_store %arg4[%c0_11, %c0_12, %c0_13], %17 {strides = array<i32>} : memref<2x4x256xf32, #tpu.memory_space<vmem>>, vector<2x4x256xf32>,
    return
  }
  func.func @transform_0(%arg0: i32) -> (i32, i32, i32) {
    %c0_i32 = arith.constant 0 : i32
    %c0_i32_0 = arith.constant 0 : i32
    %c0_i32_1 = arith.constant 0 : i32
    %c0_i32_2 = arith.constant 0 : i32
    return %c0_i32, %c0_i32_0, %c0_i32_1 : i32, i32, i32
  }
  func.func @transform_1(%arg0: i32) -> (i32, i32) {
    %c0_i32 = arith.constant 0 : i32
    %c0_i32_0 = arith.constant 0 : i32
    %c0_i32_1 = arith.constant 0 : i32
    return %c0_i32, %c0_i32_0 : i32, i32
  }
  func.func @transform_2(%arg0: i32) -> (i32, i32) {
    %c0_i32 = arith.constant 0 : i32
    %c0_i32_0 = arith.constant 0 : i32
    %c0_i32_1 = arith.constant 0 : i32
    return %c0_i32, %c0_i32_0 : i32, i32
  }
  func.func @transform_3(%arg0: i32) -> (i32, i32, i32) {
    %c0_i32 = arith.constant 0 : i32
    %c0_i32_0 = arith.constant 0 : i32
    %c0_i32_1 = arith.constant 0 : i32
    %c0_i32_2 = arith.constant 0 : i32
    return %c0_i32, %c0_i32_0, %c0_i32_1 : i32, i32, i32
  }
}

</mosaic_0001>

<llo_original>
// kernel: tpu_custom_call.1
$region0: #{tpu_custom_call.1}
  #allocation0 [shape = 'u32[]', space=smem, size = 0x4, offset = 0x4, fixed_abs, tag = 'smem constant byte address 0x4 - core index']
  #allocation1 [shape = 'u32[144,128]{1,0:T(1,128)}', space=vmem, size = 0x12000, scoped, tag = 'internal scratch']
  %s0 = inlined_call_operand.hbm [shape: f32[2,4,256], index: 0, kind: input, shape index: {}]
  %s1 = inlined_call_operand.vmem [shape: f32[4,2], index: 1, kind: input, shape index: {}]
  %s2 = inlined_call_operand.vmem [shape: f32[2,4], index: 2, kind: input, shape index: {}]
  %s3 = inlined_call_operand.hbm [shape: f32[2,4,256], index: 3, kind: output, shape index: {}]
  %s4 = sld [smem:[#allocation0]]
  $region26: #{tpu_custom_call.1} parent=0
    _
  %s6 = ssub.s32 1, %s4
  %s7 = scalar_select 0, %s6, %s4
  $region1: #{tpu_custom_call.1} parent=0
    #allocation2 [shape = 'u8[8192]{0}', space=vmem, size = 0x2000, scoped, tag = 'input window, operand 0, single buffered']
    #allocation3 [shape = 's32[1]{0}', space=sflag, size = 0x4, scoped, tag = 'scoped memory for tpu_custom_call.1']
    #allocation4 [shape = 's32[1]{0}', space=sflag, size = 0x4, scoped, tag = 'scoped memory for tpu_custom_call.1']
    #allocation5 [shape = 'u8[8192]{0}', space=vmem, size = 0x2000, scoped, tag = 'output window, operand 0, single buffered']
    %8 = vsyncpa [#allocation3], 0
    %9 = vsyncpa [#allocation4], 0
    // Predicated region
    $region2: #{tpu_custom_call.1} parent=1 // pred_check
      _
    $region3: #{tpu_custom_call.1} parent=1 // pred_check_branch
      %11 = sbr.rel (0) target = $region5
    $region4: #{tpu_custom_call.1} parent=1 // pred_region
      %s13 = ssub.s32 256, 256
      %14 = vsyncadd [#allocation3], %s13
      %s15 = sshll.u32 [#allocation2], 4
      %s16 = int_to_ptr.vmem [resolvable:$true] %s15
      %21 = dma.hbm_to_vmem [thread:$0]  %s0, 256, %s16, [#allocation3], 128, 128, 8
    $region5: #{tpu_custom_call.1} parent=1 // pred_fallthru
      _
    // Predicated region
    $region6: #{tpu_custom_call.1} parent=1 // pred_check
      _
    $region7: #{tpu_custom_call.1} parent=1 // pred_check_branch
      %23 = sbr.rel (0) target = $region9
    $region8: #{tpu_custom_call.1} parent=1 // pred_region
      _
    $region9: #{tpu_custom_call.1} parent=1 // pred_fallthru
      _
    // Predicated region
    $region10: #{tpu_custom_call.1} parent=1 // pred_check
      _
    $region11: #{tpu_custom_call.1} parent=1 // pred_check_branch
      %25 = sbr.rel (0) target = $region13
    $region12: #{tpu_custom_call.1} parent=1 // pred_region
      _
    $region13: #{tpu_custom_call.1} parent=1 // pred_fallthru
      _
    // Predicated region
    $region14: #{tpu_custom_call.1} parent=1 // pred_check
      _
    $region15: #{tpu_custom_call.1} parent=1 // pred_check_branch
      %27 = sbr.rel (0) target = $region17
    $region16: #{tpu_custom_call.1} parent=1 // pred_region
      %28 = dma.done [#allocation3], 256
    $region17: #{tpu_custom_call.1} parent=1 // pred_fallthru
      _
    %v29 = vld [vmem:[#allocation2] sm:$0xff]
    %v30 = vld [vmem:[#allocation2 + $0x8] sm:$0xff]
    %v33 = vcombine.high %v29, %v29
    %v34 = vcombine.high %v30, %v30
    %vm37 = vcmask 1043456
    %v38 = vsel %vm37, %v29, 0.0
    %v39 = vsel %vm37, %v33, 0.0
    %v40 = vadd.f32 %v38, %v39
    %41 = vadd.xlane.f32.xlu0 %v40
    %v42 = vpop.xlane.xlu0 %41
    %v43 = vsel %vm37, %v30, 0.0
    %v44 = vsel %vm37, %v34, 0.0
    %v45 = vadd.f32 %v43, %v44
    %46 = vadd.xlane.f32.xlu0 %v45
    %v47 = vpop.xlane.xlu0 %46
    %v48 = vmul.f32 %v42, 0.00390625
    %v49 = vmul.f32 %v47, 0.00390625
    %v50 = vld [vmem:[%s1] sm:$0xf]
    %v53 = vlaneseq
    %v54 = vand.u32 %v53, 127
    %v55 = vlaneseq
    %v56 = vshrl.u32 %v55, 7
    %v57 = vsub.s32 %v54, %v56
    %v58 = vrot.slane %v48, %v57
    %v59 = vlaneseq
    %v60 = vshrl.u32 %v59, 7
    %v61 = vsub.s32 %v54, %v60
    %v62 = vrot.slane %v49, %v61
    %vm63 = vcmask 1041409
    %v64 = vsel %vm63, %v62, %v58
    %vm65 = vcmask 31744
    %v66 = vsel %vm65, %v64, 0
    %v69 = vsel %vm37, %v50, 0
    %71 = vmatprep.subr.mxu0 0.0
    %72 = vmatpush1.msra.mxu0 0.0
    %73 = vmatprep.subr.mxu0 0.0
    %74 = vmatpush1.msra.mxu0 0.0
    %75 = vmatprep.subr.mxu0 0.0
    %76 = vmatpush1.msra.mxu0 0.0
    %77 = vmatprep.subr.mxu0 0.0
    %78 = vmatpush1.msra.mxu0 0.0
    %79 = vmatprep.subr.mxu0 0.0
    %80 = vmatpush1.msra.mxu0 0.0
    %81 = vmatprep.subr.mxu0 0.0
    %82 = vmatpush1.msra.mxu0 0.0
    %83 = vmatprep.subr.mxu0 0.0
    %84 = vmatpush1.msra.mxu0 0.0
    %85 = vmatprep.subr.mxu0 0.0
    %86 = vmatpush1.msra.mxu0 0.0
    %87 = vmatprep.subr.mxu0 0.0
    %88 = vmatpush1.msra.mxu0 0.0
    %89 = vmatprep.subr.mxu0 0.0
    %90 = vmatpush1.msra.mxu0 0.0
    %91 = vmatprep.subr.mxu0 0.0
    %92 = vmatpush1.msra.mxu0 0.0
    %93 = vmatprep.subr.mxu0 0.0
    %94 = vmatpush1.msra.mxu0 0.0
    %95 = vmatprep.subr.mxu0 0.0
    %96 = vmatpush1.msra.mxu0 0.0
    %97 = vmatprep.subr.mxu0 0.0
    %98 = vmatpush1.msra.mxu0 0.0
    %99 = vmatprep.subr.mxu0 0.0
    %100 = vmatpush1.msra.mxu0 0.0
    %101 = vmatprep.subr.mxu0 0.0
    %102 = vmatpush1.msra.mxu0 %v69
    %103 = vmatprep.subr.mxu0 0.0
    %104 = vmatpush2.msra.mxu0 0.0
    %105 = vmatprep.subr.mxu0 0.0
    %106 = vmatpush2.msra.mxu0 0.0
    %107 = vmatprep.subr.mxu0 0.0
    %108 = vmatpush2.msra.mxu0 0.0
    %109 = vmatprep.subr.mxu0 0.0
    %110 = vmatpush2.msra.mxu0 0.0
    %111 = vmatprep.subr.mxu0 0.0
    %112 = vmatpush2.msra.mxu0 0.0
    %113 = vmatprep.subr.mxu0 0.0
    %114 = vmatpush2.msra.mxu0 0.0
    %115 = vmatprep.subr.mxu0 0.0
    %116 = vmatpush2.msra.mxu0 0.0
    %117 = vmatprep.subr.mxu0 0.0
    %118 = vmatpush2.msra.mxu0 0.0
    %119 = vmatprep.subr.mxu0 0.0
    %120 = vmatpush2.msra.mxu0 0.0
    %121 = vmatprep.subr.mxu0 0.0
    %122 = vmatpush2.msra.mxu0 0.0
    %123 = vmatprep.subr.mxu0 0.0
    %124 = vmatpush2.msra.mxu0 0.0
    %125 = vmatprep.subr.mxu0 0.0
    %126 = vmatpush2.msra.mxu0 0.0
    %127 = vmatprep.subr.mxu0 0.0
    %128 = vmatpush2.msra.mxu0 0.0
    %129 = vmatprep.subr.mxu0 0.0
    %130 = vmatpush2.msra.mxu0 0.0
    %131 = vmatprep.subr.mxu0 0.0
    %132 = vmatpush2.msra.mxu0 0.0
    %133 = vmatprep.subr.mxu0 0.0
    %134 = vmatpush2.msra.mxu0 0.0
    %135 = vmatprep.mubr.f32.mxu0 0.0
    %136 = vmatmul.mubr.f32.gmra.mxu0 %v66
    %v137 = vpop.f32.mrf.mxu0
    %v138 = vadd.f32 0.0, %v137
    %v139 = vpop.f32.mrf.mxu0
    %140 = vdwg.mxu0
    %v141 = vmax.f32 %v138, 0.0
    %v142 = vld [vmem:[%s2] sm:$0x3]
    %vm143 = vcmask 15360
    %v145 = vsel %vm143, %v141, 0
    %vm147 = vcmask 1041408
    %v149 = vsel %vm147, %v142, 0
    %151 = vmatprep.subr.mxu0 0.0
    %152 = vmatpush1.msra.mxu0 0.0
    %153 = vmatprep.subr.mxu0 0.0
    %154 = vmatpush1.msra.mxu0 0.0
    %155 = vmatprep.subr.mxu0 0.0
    %156 = vmatpush1.msra.mxu0 0.0
    %157 = vmatprep.subr.mxu0 0.0
    %158 = vmatpush1.msra.mxu0 0.0
    %159 = vmatprep.subr.mxu0 0.0
    %160 = vmatpush1.msra.mxu0 0.0
    %161 = vmatprep.subr.mxu0 0.0
    %162 = vmatpush1.msra.mxu0 0.0
    %163 = vmatprep.subr.mxu0 0.0
    %164 = vmatpush1.msra.mxu0 0.0
    %165 = vmatprep.subr.mxu0 0.0
    %166 = vmatpush1.msra.mxu0 0.0
    %167 = vmatprep.subr.mxu0 0.0
    %168 = vmatpush1.msra.mxu0 0.0
    %169 = vmatprep.subr.mxu0 0.0
    %170 = vmatpush1.msra.mxu0 0.0
    %171 = vmatprep.subr.mxu0 0.0
    %172 = vmatpush1.msra.mxu0 0.0
    %173 = vmatprep.subr.mxu0 0.0
    %174 = vmatpush1.msra.mxu0 0.0
    %175 = vmatprep.subr.mxu0 0.0
    %176 = vmatpush1.msra.mxu0 0.0
    %177 = vmatprep.subr.mxu0 0.0
    %178 = vmatpush1.msra.mxu0 0.0
    %179 = vmatprep.subr.mxu0 0.0
    %180 = vmatpush1.msra.mxu0 0.0
    %181 = vmatprep.subr.mxu0 0.0
    %182 = vmatpush1.msra.mxu0 %v149
    %183 = vmatprep.subr.mxu0 0.0
    %184 = vmatpush2.msra.mxu0 0.0
    %185 = vmatprep.subr.mxu0 0.0
    %186 = vmatpush2.msra.mxu0 0.0
    %187 = vmatprep.subr.mxu0 0.0
    %188 = vmatpush2.msra.mxu0 0.0
    %189 = vmatprep.subr.mxu0 0.0
    %190 = vmatpush2.msra.mxu0 0.0
    %191 = vmatprep.subr.mxu0 0.0
    %192 = vmatpush2.msra.mxu0 0.0
    %193 = vmatprep.subr.mxu0 0.0
    %194 = vmatpush2.msra.mxu0 0.0
    %195 = vmatprep.subr.mxu0 0.0
    %196 = vmatpush2.msra.mxu0 0.0
    %197 = vmatprep.subr.mxu0 0.0
    %198 = vmatpush2.msra.mxu0 0.0
    %199 = vmatprep.subr.mxu0 0.0
    %200 = vmatpush2.msra.mxu0 0.0
    %201 = vmatprep.subr.mxu0 0.0
    %202 = vmatpush2.msra.mxu0 0.0
    %203 = vmatprep.subr.mxu0 0.0
    %204 = vmatpush2.msra.mxu0 0.0
    %205 = vmatprep.subr.mxu0 0.0
    %206 = vmatpush2.msra.mxu0 0.0
    %207 = vmatprep.subr.mxu0 0.0
    %208 = vmatpush2.msra.mxu0 0.0
    %209 = vmatprep.subr.mxu0 0.0
    %210 = vmatpush2.msra.mxu0 0.0
    %211 = vmatprep.subr.mxu0 0.0
    %212 = vmatpush2.msra.mxu0 0.0
    %213 = vmatprep.subr.mxu0 0.0
    %214 = vmatpush2.msra.mxu0 0.0
    %215 = vmatprep.mubr.f32.mxu0 0.0
    %216 = vmatmul.mubr.f32.gmra.mxu0 %v145
    %v217 = vpop.f32.mrf.mxu0
    %v218 = vadd.f32 0.0, %v217
    %v219 = vpop.f32.mrf.mxu0
    %220 = vdwg.mxu0
    %v221 = vxor.u32 %v218, 2147483648
    %v222 = vmul.f32 %v221, 1.442695
    %v223 = vpow.pop %v222
    %v224 = vadd.f32 %v223, 1.0
    %v225 = vrcp.pop %v224
    %v226 = vmul.f32 1.0, %v225
    %v227 = vlaneseq
    %v228 = vshrl.u32 %v227, 7
    %v229 = vsub.s32 0, %v228
    %v230 = vrot.slane %v226, %v229
    %232 = vbcast.lane.b32.xlu0 %v230, 256
    %v233 = vpop.permute.xlu0 %232
    %v234 = vlaneseq
    %v235 = vshrl.u32 %v234, 7
    %v236 = vsub.s32 1, %v235
    %v237 = vrot.slane %v226, %v236
    %239 = vbcast.lane.b32.xlu0 %v237, 256
    %v240 = vpop.permute.xlu0 %239
    %v244 = vunpack.c.l.s4 839922192
    %v245 = vunpack.c.0.s8 %v244
    %v246 = vlaneseq
    %v247 = vshrl.u32 %v246, 7
    %v248 = vsub.s32 %v245, %v247
    %v249 = vrot.slane %v233, %v248
    %v251 = vunpack.c.l.s4 839922192
    %v252 = vunpack.c.0.s8 %v251
    %v253 = vlaneseq
    %v254 = vshrl.u32 %v253, 7
    %v255 = vsub.s32 %v252, %v254
    %v256 = vrot.slane %v240, %v255
    %v259 = vmul.f32 %v29, %v249
    %v260 = vmul.f32 %v30, %v256
    %261 = vst [vmem:[#allocation5] sm:$0xff] %v259
    %262 = vst [vmem:[#allocation5 + $0x8] sm:$0xff] %v260
    // Predicated region
    $region18: #{tpu_custom_call.1} parent=1 // pred_check
      _
    $region19: #{tpu_custom_call.1} parent=1 // pred_check_branch
      %264 = sbr.rel (0) target = $region21
    $region20: #{tpu_custom_call.1} parent=1 // pred_region
      %s266 = ssub.s32 256, 256
      %267 = vsyncadd [#allocation4], %s266
      %s268 = sshll.u32 [#allocation5], 4
      %s269 = int_to_ptr.vmem [resolvable:$true] %s268
      %274 = dma.vmem_to_hbm [thread:$0]  %s269, 256, %s3, [#allocation4], 128, 128, 8
    $region21: #{tpu_custom_call.1} parent=1 // pred_fallthru
      _
    // Predicated region
    $region22: #{tpu_custom_call.1} parent=1 // pred_check
      _
    $region23: #{tpu_custom_call.1} parent=1 // pred_check_branch
      %276 = sbr.rel (0) target = $region25
    $region24: #{tpu_custom_call.1} parent=1 // pred_region
      %277 = dma.done [#allocation4], 256
    $region25: #{tpu_custom_call.1} parent=1 // pred_fallthru
      _
    %278 = vsyncpa [#allocation3], 1
    %279 = vsyncpa [#allocation4], 1

</llo_original>
